<compile_context>
chip_gen: v5e
topology: v5e:2x2
jax: 0.10.0
libtpu: 0.0.40
codegen_flags: <defaults>
</compile_context>

<pallas_src>
import functools

import jax
import jax.numpy as jnp
from jax import lax
from jax.experimental import pallas as pl
from jax.experimental.pallas import tpu as pltpu


def _round_up(x, m):
    return (x + m - 1) // m * m


def _vmem_capacity_bytes():
    try:
        return int(pltpu.get_tpu_info().vmem_capacity_bytes)
    except Exception:
        return 64 * 1024 * 1024  # conservative (v7x-sized) fallback


def _netvlad_kernel(x_ref, w_ref, b_ref, cent_ref, out_ref, acc_ref, asum_ref, *,
                    bt, C, K, n_pad, mm_dtype, approx_recip):
    # x_ref:    [bt, C, st]  descriptors in their native dtype/layout
    # w_ref:    [K, C]       conv weight = 2*alpha*centroids   (matmul dtype)
    # b_ref:    [K, 1]       conv bias   = -alpha*||centroid|| (f32)
    # cent_ref: [K, C]       raw centroids for the residual    (f32)
    # out_ref:  [bt, K, C]   final normalized VLAD
    # acc_ref:  [bt, C, K]   f32 accumulator of sum_s a[k,s]*x[c,s]
    # asum_ref: [bt, K, 1]   f32 accumulator of sum_s a[k,s]
    si = pl.program_id(1)
    ns = pl.num_programs(1)

    @pl.when(si == 0)
    def _init():
        acc_ref[...] = jnp.zeros_like(acc_ref)
        asum_ref[...] = jnp.zeros_like(asum_ref)

    w = w_ref[...]                                   # (K, C)
    bias = b_ref[...]                                # (K, 1) f32

    for b in range(bt):                              # bt is small & static (unrolled)
        xb = x_ref[b]                                # (C, st) input dtype
        # descriptor-wise L2 norm over channels: f32 statistics, no f32 copy of
        # the tile when it already is the matmul dtype
        ss = jnp.sum(jnp.square(xb.astype(jnp.float32)), axis=0, keepdims=True)
        inv = lax.rsqrt(jnp.maximum(ss, 1e-24))      # (1, st) == 1/max(||x||, 1e-12)
        if xb.dtype == mm_dtype:
            xm = xb * inv.astype(mm_dtype)
        else:
            xm = (xb.astype(jnp.float32) * inv).astype(mm_dtype)   # (C, st)

        # 1x1 conv: logits[k,s] = sum_c (2*alpha*cent)[k,c] * x_hat[c,s] + bias[k]
        lg = lax.dot_general(w, xm, (((1,), (0,)), ((), ())),
                             preferred_element_type=jnp.float32)   # (K, st)
        lg = lg + bias

        # softmax over clusters (K on the sublane axis)
        m = jnp.max(lg, axis=0, keepdims=True)
        e = jnp.exp(lg - m)
        d = jnp.sum(e, axis=0, keepdims=True)
        if approx_recip:
            a = e * pl.reciprocal(d, approx=True)    # EUP slot, near-free
        else:
            a = e / d                                # (K, st) f32

        # a_sum via an XLU lane reduce (no ones-column matmul trick)
        asum_ref[b] += jnp.sum(a, axis=1, keepdims=True)            # (K, 1)

        # VLAD aggregation: acc[c,k] += sum_s x_hat[c,s] * a[k,s]
        a_t = jnp.transpose(a, (1, 0)).astype(mm_dtype)             # (st, K) small transpose
        acc_ref[b] += lax.dot_general(xm, a_t, (((1,), (0,)), ((), ())),
                                      preferred_element_type=jnp.float32)  # (C, K)

    @pl.when(si == ns - 1)
    def _finalize():
        asum = asum_ref[...]                         # (bt, K, 1)
        if n_pad:
            # zero-padded spatial columns contribute exactly softmax(bias) to
            # a_sum and nothing to acc; remove that constant mass once here.
            mb = jnp.max(bias, axis=0, keepdims=True)
            eb = jnp.exp(bias - mb)
            db = jnp.sum(eb, axis=0, keepdims=True)
            if approx_recip:
                a_pad = eb * pl.reciprocal(db, approx=True)
            else:
                a_pad = eb / db                      # (K, 1)
            asum = asum - jnp.float32(n_pad) * a_pad[None]
        vlad = jnp.transpose(acc_ref[...], (0, 2, 1))               # (bt, K, C), once per tile
        vlad = vlad - asum * cent_ref[...][None]                    # residual vs raw centroids
        vn = jnp.sum(vlad * vlad, axis=2, keepdims=True)
        vlad = vlad * lax.rsqrt(jnp.maximum(vn, 1e-24))             # intra-normalization
        gn = jnp.sum(vlad * vlad, axis=(1, 2), keepdims=True)
        vlad = vlad * lax.rsqrt(jnp.maximum(gn, 1e-24))             # global L2 normalization
        out_ref[...] = vlad.astype(out_ref.dtype)


def netvlad_forward(x_nchw, centroids, alpha=1.0, *, matmul_dtype=jnp.bfloat16,
                    b_tile=8, s_tile=None):
    """NetVLAD forward. x_nchw: [N, C, H, W], centroids: [K, C] -> [N, K*C] (f32)."""
    N, C, H, W = x_nchw.shape
    K = centroids.shape[0]
    S = H * W
    in_bytes = jnp.dtype(x_nchw.dtype).itemsize
    mm_bytes = jnp.dtype(matmul_dtype).itemsize
    is_bf16 = jnp.dtype(matmul_dtype) == jnp.dtype(jnp.bfloat16)
    out_dtype = jnp.bfloat16 if is_bf16 else jnp.float32
    out_bytes = jnp.dtype(out_dtype).itemsize

    # batch tile: a divisor of N (no OOB batch blocks); keep the "parallel"
    # batch axis at >= 2 steps so it can shard across v7x's two TensorCores.
    bt = 1
    for cand in range(max(1, min(b_tile, N)), 0, -1):
        if N % cand == 0 and (N // cand >= 2 or N == 1):
            bt = cand
            break

    # VMEM-budget-driven S tile (includes in-body temporaries).
    vmem_cap = _vmem_capacity_bytes()
    budget = int(0.55 * vmem_cap)

    def need_bytes(st):
        x_in = 2 * bt * C * st * in_bytes                         # input block, double-buffered
        out_b = 2 * bt * K * C * out_bytes                        # output block, double-buffered
        scr = bt * (C * K + K) * 4                                # acc + a_sum scratch
        par = 2 * (K * C * (mm_bytes + 4) + K * 4)                # w, centroids, bias
        tmp = 2 * (C * st * mm_bytes + 3 * K * st * 4 + C * K * 4)  # x_hat, softmax temps, a^T
        return x_in + out_b + scr + par + tmp + (2 << 20)

    if s_tile is not None:
        st = S if int(s_tile) >= S else max(128, (int(s_tile) // 128) * 128)
    elif need_bytes(S) <= budget:
        st = S                                                    # whole spatial extent per step
    else:
        st = 0
        for cand in range((S // 128) * 128, 0, -128):             # largest 128-multiple divisor
            if S % cand == 0 and need_bytes(cand) <= budget:
                st = cand
                break
        if st == 0:                                               # rare fallback: pad S
            st = 128
            while st + 128 <= _round_up(S, 128) and need_bytes(st + 128) <= budget:
                st += 128

    S_pad = S if st >= S else _round_up(S, st)
    st = min(st, S_pad)
    n_pad = S_pad - S

    # glue: NCHW -> [N, C, S] is a free reshape; x keeps its dtype (single HBM read).
    x_ncs = x_nchw.reshape(N, C, S)
    if n_pad:
        x_ncs = jnp.pad(x_ncs, ((0, 0), (0, 0), (0, n_pad)))

    # conv parameters implied by _init_params (weight = 2*alpha*centroids,
    # bias = -alpha*||centroid||); raw centroids are used for the residual.
    w = (2.0 * alpha * centroids).astype(matmul_dtype)                         # (K, C)
    bias = (-alpha * jnp.linalg.norm(centroids, axis=1)).reshape(K, 1).astype(jnp.float32)
    cent = centroids.astype(jnp.float32)                                       # (K, C)

    need = need_bytes(st)
    vmem_limit = int(min(0.8 * vmem_cap, max(need * 1.4, 32 * 1024 * 1024)))
    vmem_limit = max(vmem_limit, min(int(0.9 * vmem_cap), int(need * 1.25)))

    kernel = functools.partial(
        _netvlad_kernel, bt=bt, C=C, K=K, n_pad=n_pad, mm_dtype=matmul_dtype,
        approx_recip=is_bf16)

    out = pl.pallas_call(
        kernel,
        out_shape=jax.ShapeDtypeStruct((N, K, C), out_dtype),
        grid_spec=pltpu.PrefetchScalarGridSpec(
            num_scalar_prefetch=0,
            grid=(N // bt, S_pad // st),
            in_specs=[
                pl.BlockSpec((bt, C, st), lambda b, s: (b, 0, s)),
                pl.BlockSpec((K, C), lambda b, s: (0, 0)),
                pl.BlockSpec((K, 1), lambda b, s: (0, 0)),
                pl.BlockSpec((K, C), lambda b, s: (0, 0)),
            ],
            out_specs=pl.BlockSpec((bt, K, C), lambda b, s: (b, 0, 0)),
            scratch_shapes=[pltpu.VMEM((bt, C, K), jnp.float32),
                            pltpu.VMEM((bt, K, 1), jnp.float32)],
        ),
        compiler_params=pltpu.CompilerParams(
            dimension_semantics=("parallel", "arbitrary"),
            vmem_limit_bytes=vmem_limit),
    )(x_ncs, w, bias, cent)

    # flatten [N, K, C] -> [N, K*C]; cast to f32 (tiny) for drop-in semantics
    return out.reshape(N, K * C).astype(jnp.float32)


def netvlad_reference(x_nchw, centroids, alpha=1.0):
    """Pure-JAX reference matching the PyTorch forward exactly."""
    N, C, H, W = x_nchw.shape
    x = x_nchw / jnp.maximum(
        jnp.linalg.norm(x_nchw, axis=1, keepdims=True), 1e-12)
    xf = x.reshape(N, C, H * W)                                   # [N, C, S]
    w = 2.0 * alpha * centroids                                   # [K, C]
    b = -alpha * jnp.linalg.norm(centroids, axis=1)               # [K]
    logits = jnp.einsum('ncs,kc->nks', xf, w) + b[None, :, None]
    a = jax.nn.softmax(logits, axis=1)                            # [N, K, S]
    vlad = (jnp.einsum('nks,ncs->nkc', a, xf)
            - jnp.sum(a, axis=-1)[:, :, None] * centroids[None])  # [N, K, C]
    vlad = vlad / jnp.maximum(
        jnp.linalg.norm(vlad, axis=2, keepdims=True), 1e-12)
    vlad = vlad.reshape(N, -1)
    vlad = vlad / jnp.maximum(
        jnp.linalg.norm(vlad, axis=1, keepdims=True), 1e-12)
    return vlad


if __name__ == "__main__":
    # small, module-consistent shapes: N=2, dim(C)=16, K(num_clusters)=8, H=W=8
    N, C, H, W, K = 2, 16, 8, 8, 8
    key = jax.random.PRNGKey(0)
    kx, kc, k3, k4 = jax.random.split(key, 4)
    x = jax.random.normal(kx, (N, C, H, W), dtype=jnp.float32)
    centroids = jax.random.uniform(kc, (K, C), dtype=jnp.float32)  # torch.rand analog

    ref = netvlad_reference(x, centroids)

    # 1) f32 MXU operands: tight numerical check (single S step, no padding)
    out_f32 = jax.block_until_ready(
        netvlad_forward(x, centroids, matmul_dtype=jnp.float32))
    assert out_f32.shape == (N, K * C)
    assert jnp.allclose(out_f32, ref, atol=1e-4, rtol=1e-4), "f32 mismatch vs reference"

    # 2) bf16 MXU operands (default): loose numerical check
    out_bf16 = jax.block_until_ready(netvlad_forward(x, centroids))
    assert out_bf16.shape == (N, K * C)
    assert jnp.allclose(out_bf16, ref, atol=3e-2, rtol=3e-2), "bf16 mismatch vs reference"

    # 3) multi-S-step accumulation path (S=256, st=128, no padding), f32 tight check
    x3 = jax.random.normal(k3, (N, C, 16, 16), dtype=jnp.float32)
    ref3 = netvlad_reference(x3, centroids)
    out3 = jax.block_until_ready(
        netvlad_forward(x3, centroids, matmul_dtype=jnp.float32, s_tile=128))
    assert jnp.allclose(out3, ref3, atol=1e-4, rtol=1e-4), "multi-step mismatch"

    # 4) ragged-S path (S=200, st=128 -> 56 padded columns + a_sum correction), f32
    x4 = jax.random.normal(k4, (N, C, 10, 20), dtype=jnp.float32)
    ref4 = netvlad_reference(x4, centroids)
    out4 = jax.block_until_ready(
        netvlad_forward(x4, centroids, matmul_dtype=jnp.float32, s_tile=128))
    assert jnp.allclose(out4, ref4, atol=1e-4, rtol=1e-4), "padded-S mismatch"

    print("KERNEL_OK")
</pallas_src>

<mosaic_0001>
module attributes {stable_mosaic.version = 11 : i64} {
  func.func @_netvlad_kernel(%arg0: i32, %arg1: i32, %arg2: memref<1x16x64xf32, #tpu.memory_space<vmem>>, %arg3: memref<8x16xf32, #tpu.memory_space<vmem>>, %arg4: memref<8x1xf32, #tpu.memory_space<vmem>>, %arg5: memref<8x16xf32, #tpu.memory_space<vmem>>, %arg6: memref<1x8x16xf32, #tpu.memory_space<vmem>>, %arg7: memref<1x16x8xf32, #tpu.memory_space<vmem>>, %arg8: memref<1x8x1xf32, #tpu.memory_space<vmem>>) attributes {dimension_semantics = [#tpu.dimension_semantics<parallel>, #tpu.dimension_semantics<arbitrary>], iteration_bounds = array<i64: 2, 1>, scalar_prefetch = 0 : i64, scratch_operands = 2 : i64, tpu.core_type = #tpu.core_type<tc>, window_params = [{transform_indices = @transform_0, window_bounds = array<i64: 1, 16, 64>}, {pipeline_mode = #tpu.pipeline_mode<synchronous>, transform_indices = @transform_1, window_bounds = array<i64: 8, 16>}, {pipeline_mode = #tpu.pipeline_mode<synchronous>, transform_indices = @transform_2, window_bounds = array<i64: 8, 1>}, {pipeline_mode = #tpu.pipeline_mode<synchronous>, transform_indices = @transform_3, window_bounds = array<i64: 8, 16>}, {transform_indices = @transform_4, window_bounds = array<i64: 1, 8, 16>}]} {
    %c0_i32 = arith.constant 0 : i32
    %0 = arith.cmpi eq, %arg1, %c0_i32 : i32
    %1 = arith.extui %0 : i1 to i32
    %c0_i32_0 = arith.constant 0 : i32
    %2 = arith.cmpi ne, %1, %c0_i32_0 : i32
    scf.if %2 {
      %cst_27 = arith.constant 0.000000e+00 : f32
      %46 = vector.broadcast %cst_27 : f32 to vector<1x16x8xf32>
      %c0_28 = arith.constant 0 : index
      %c0_29 = arith.constant 0 : index
      %c0_30 = arith.constant 0 : index
      %47 = vector.load %arg7[%c0_28, %c0_29, %c0_30] : memref<1x16x8xf32, #tpu.memory_space<vmem>>, vector<1x16x8xf32>
      tpu.vector_store %arg7[%c0_28, %c0_29, %c0_30], %46 {strides = array<i32>} : memref<1x16x8xf32, #tpu.memory_space<vmem>>, vector<1x16x8xf32>,
      %cst_31 = arith.constant 0.000000e+00 : f32
      %48 = vector.broadcast %cst_31 : f32 to vector<1x8x1xf32>
      %c0_32 = arith.constant 0 : index
      %c0_33 = arith.constant 0 : index
      %c0_34 = arith.constant 0 : index
      %49 = vector.load %arg8[%c0_32, %c0_33, %c0_34] : memref<1x8x1xf32, #tpu.memory_space<vmem>>, vector<1x8x1xf32>
      tpu.vector_store %arg8[%c0_32, %c0_33, %c0_34], %48 {strides = array<i32>} : memref<1x8x1xf32, #tpu.memory_space<vmem>>, vector<1x8x1xf32>,
    } else {
    }
    %c0 = arith.constant 0 : index
    %c0_1 = arith.constant 0 : index
    %3 = vector.load %arg3[%c0, %c0_1] : memref<8x16xf32, #tpu.memory_space<vmem>>, vector<8x16xf32>
    %c0_2 = arith.constant 0 : index
    %c0_3 = arith.constant 0 : index
    %4 = vector.load %arg4[%c0_2, %c0_3] : memref<8x1xf32, #tpu.memory_space<vmem>>, vector<8x1xf32>
    %c0_4 = arith.constant 0 : index
    %c0_5 = arith.constant 0 : index
    %c0_6 = arith.constant 0 : index
    %5 = vector.load %arg2[%c0_4, %c0_5, %c0_6] : memref<1x16x64xf32, #tpu.memory_space<vmem>>, vector<1x16x64xf32>
    %6 = vector.shape_cast %5 : vector<1x16x64xf32> to vector<16x64xf32>
    %7 = arith.mulf %6, %6 : vector<16x64xf32>
    %cst = arith.constant dense<0.000000e+00> : vector<64xf32>
    %8 = vector.multi_reduction <add>, %7, %cst [0] : vector<16x64xf32> to vector<64xf32>
    %9 = vector.shape_cast %8 : vector<64xf32> to vector<1x64xf32>
    %cst_7 = arith.constant 1.000000e-24 : f32
    %10 = vector.broadcast %cst_7 : f32 to vector<1x64xf32>
    %11 = arith.maximumf %9, %10 : vector<1x64xf32>
    %12 = math.rsqrt %11 : vector<1x64xf32>
    %13 = vector.broadcast %12 : vector<1x64xf32> to vector<16x64xf32>
    %14 = arith.mulf %6, %13 : vector<16x64xf32>
    %cst_8 = arith.constant dense<0.000000e+00> : vector<8x64xf32>
    %15 = tpu.matmul %3, %14, %cst_8 {dimension_numbers = #tpu.dot_dimension_numbers<[1], [0], [0], [1], [0, 0, 1, 1], [], []>} : vector<8x16xf32>, vector<16x64xf32>, vector<8x64xf32> -> vector<8x64xf32>
    %16 = vector.broadcast %4 : vector<8x1xf32> to vector<8x64xf32>
    %17 = arith.addf %15, %16 : vector<8x64xf32>
    %cst_9 = arith.constant dense<0xFF800000> : vector<64xf32>
    %18 = vector.multi_reduction <maximumf>, %17, %cst_9 [0] : vector<8x64xf32> to vector<64xf32>
    %19 = vector.shape_cast %18 : vector<64xf32> to vector<1x64xf32>
    %20 = vector.broadcast %19 : vector<1x64xf32> to vector<8x64xf32>
    %21 = arith.subf %17, %20 : vector<8x64xf32>
    %22 = math.exp %21 : vector<8x64xf32>
    %cst_10 = arith.constant dense<0.000000e+00> : vector<64xf32>
    %23 = vector.multi_reduction <add>, %22, %cst_10 [0] : vector<8x64xf32> to vector<64xf32>
    %24 = vector.shape_cast %23 : vector<64xf32> to vector<1x64xf32>
    %25 = vector.broadcast %24 : vector<1x64xf32> to vector<8x64xf32>
    %26 = arith.divf %22, %25 : vector<8x64xf32>
    %c0_11 = arith.constant 0 : index
    %c0_12 = arith.constant 0 : index
    %c0_13 = arith.constant 0 : index
    %27 = vector.load %arg8[%c0_11, %c0_12, %c0_13] : memref<1x8x1xf32, #tpu.memory_space<vmem>>, vector<1x8x1xf32>
    %28 = vector.shape_cast %27 : vector<1x8x1xf32> to vector<8x1xf32>
    %cst_14 = arith.constant dense<0.000000e+00> : vector<8xf32>
    %29 = vector.multi_reduction <add>, %26, %cst_14 [1] : vector<8x64xf32> to vector<8xf32>
    %30 = vector.shape_cast %29 : vector<8xf32> to vector<8x1xf32>
    %31 = arith.addf %28, %30 : vector<8x1xf32>
    %c0_15 = arith.constant 0 : index
    %c0_16 = arith.constant 0 : index
    %c0_17 = arith.constant 0 : index
    %32 = vector.load %arg8[%c0_15, %c0_16, %c0_17] : memref<1x8x1xf32, #tpu.memory_space<vmem>>, vector<1x8x1xf32>
    %33 = vector.shape_cast %32 : vector<1x8x1xf32> to vector<8x1xf32>
    %34 = vector.shape_cast %31 : vector<8x1xf32> to vector<1x8x1xf32>
    tpu.vector_store %arg8[%c0_15, %c0_16, %c0_17], %34 {strides = array<i32>} : memref<1x8x1xf32, #tpu.memory_space<vmem>>, vector<1x8x1xf32>,
    %35 = tpu.transpose %26, [1, 0] : vector<8x64xf32> -> vector<64x8xf32>
    %c0_18 = arith.constant 0 : index
    %c0_19 = arith.constant 0 : index
    %c0_20 = arith.constant 0 : index
    %36 = vector.load %arg7[%c0_18, %c0_19, %c0_20] : memref<1x16x8xf32, #tpu.memory_space<vmem>>, vector<1x16x8xf32>
    %37 = vector.shape_cast %36 : vector<1x16x8xf32> to vector<16x8xf32>
    %cst_21 = arith.constant dense<0.000000e+00> : vector<16x8xf32>
    %38 = tpu.matmul %14, %35, %cst_21 {dimension_numbers = #tpu.dot_dimension_numbers<[1], [0], [0], [1], [0, 0, 1, 1], [], []>} : vector<16x64xf32>, vector<64x8xf32>, vector<16x8xf32> -> vector<16x8xf32>
    %39 = arith.addf %37, %38 : vector<16x8xf32>
    %c0_22 = arith.constant 0 : index
    %c0_23 = arith.constant 0 : index
    %c0_24 = arith.constant 0 : index
    %40 = vector.load %arg7[%c0_22, %c0_23, %c0_24] : memref<1x16x8xf32, #tpu.memory_space<vmem>>, vector<1x16x8xf32>
    %41 = vector.shape_cast %40 : vector<1x16x8xf32> to vector<16x8xf32>
    %42 = vector.shape_cast %39 : vector<16x8xf32> to vector<1x16x8xf32>
    tpu.vector_store %arg7[%c0_22, %c0_23, %c0_24], %42 {strides = array<i32>} : memref<1x16x8xf32, #tpu.memory_space<vmem>>, vector<1x16x8xf32>,
    %c0_i32_25 = arith.constant 0 : i32
    %43 = arith.cmpi eq, %arg1, %c0_i32_25 : i32
    %44 = arith.extui %43 : i1 to i32
    %c0_i32_26 = arith.constant 0 : i32
    %45 = arith.cmpi ne, %44, %c0_i32_26 : i32
    scf.if %45 {
      %c0_27 = arith.constant 0 : index
      %c0_28 = arith.constant 0 : index
      %c0_29 = arith.constant 0 : index
      %46 = vector.load %arg8[%c0_27, %c0_28, %c0_29] : memref<1x8x1xf32, #tpu.memory_space<vmem>>, vector<1x8x1xf32>
      %c0_30 = arith.constant 0 : index
      %c0_31 = arith.constant 0 : index
      %c0_32 = arith.constant 0 : index
      %47 = vector.load %arg7[%c0_30, %c0_31, %c0_32] : memref<1x16x8xf32, #tpu.memory_space<vmem>>, vector<1x16x8xf32>
      %48 = tpu.transpose %47, [0, 2, 1] : vector<1x16x8xf32> -> vector<1x8x16xf32>
      %c0_33 = arith.constant 0 : index
      %c0_34 = arith.constant 0 : index
      %49 = vector.load %arg5[%c0_33, %c0_34] : memref<8x16xf32, #tpu.memory_space<vmem>>, vector<8x16xf32>
      %50 = vector.shape_cast %49 : vector<8x16xf32> to vector<1x8x16xf32>
      %51 = vector.broadcast %46 : vector<1x8x1xf32> to vector<1x8x16xf32>
      %52 = arith.mulf %51, %50 : vector<1x8x16xf32>
      %53 = arith.subf %48, %52 : vector<1x8x16xf32>
      %54 = arith.mulf %53, %53 : vector<1x8x16xf32>
      %cst_35 = arith.constant dense<0.000000e+00> : vector<1x8xf32>
      %55 = vector.multi_reduction <add>, %54, %cst_35 [2] : vector<1x8x16xf32> to vector<1x8xf32>
      %56 = vector.shape_cast %55 : vector<1x8xf32> to vector<1x8x1xf32>
      %cst_36 = arith.constant 1.000000e-24 : f32
      %57 = vector.broadcast %cst_36 : f32 to vector<1x8x1xf32>
      %58 = arith.maximumf %56, %57 : vector<1x8x1xf32>
      %59 = math.rsqrt %58 : vector<1x8x1xf32>
      %60 = vector.broadcast %59 : vector<1x8x1xf32> to vector<1x8x16xf32>
      %61 = arith.mulf %53, %60 : vector<1x8x16xf32>
      %62 = arith.mulf %61, %61 : vector<1x8x16xf32>
      %cst_37 = arith.constant dense<0.000000e+00> : vector<1xf32>
      %63 = vector.multi_reduction <add>, %62, %cst_37 [1, 2] : vector<1x8x16xf32> to vector<1xf32>
      %64 = vector.shape_cast %63 : vector<1xf32> to vector<1x1x1xf32>
      %cst_38 = arith.constant 1.000000e-24 : f32
      %65 = vector.broadcast %cst_38 : f32 to vector<1x1x1xf32>
      %66 = arith.maximumf %64, %65 : vector<1x1x1xf32>
      %67 = math.rsqrt %66 : vector<1x1x1xf32>
      %68 = vector.broadcast %67 : vector<1x1x1xf32> to vector<1x8x16xf32>
      %69 = arith.mulf %61, %68 : vector<1x8x16xf32>
      %c0_39 = arith.constant 0 : index
      %c0_40 = arith.constant 0 : index
      %c0_41 = arith.constant 0 : index
      %70 = vector.load %arg6[%c0_39, %c0_40, %c0_41] : memref<1x8x16xf32, #tpu.memory_space<vmem>>, vector<1x8x16xf32>
      tpu.vector_store %arg6[%c0_39, %c0_40, %c0_41], %69 {strides = array<i32>} : memref<1x8x16xf32, #tpu.memory_space<vmem>>, vector<1x8x16xf32>,
    } else {
    }
    return
  }
  func.func @transform_0(%arg0: i32, %arg1: i32) -> (i32, i32, i32) {
    %c0_i32 = arith.constant 0 : i32
    %c0_i32_0 = arith.constant 0 : i32
    return %arg0, %c0_i32, %arg1 : i32, i32, i32
  }
  func.func @transform_1(%arg0: i32, %arg1: i32) -> (i32, i32) {
    %c0_i32 = arith.constant 0 : i32
    %c0_i32_0 = arith.constant 0 : i32
    %c0_i32_1 = arith.constant 0 : i32
    return %c0_i32, %c0_i32_0 : i32, i32
  }
  func.func @transform_2(%arg0: i32, %arg1: i32) -> (i32, i32) {
    %c0_i32 = arith.constant 0 : i32
    %c0_i32_0 = arith.constant 0 : i32
    %c0_i32_1 = arith.constant 0 : i32
    return %c0_i32, %c0_i32_0 : i32, i32
  }
  func.func @transform_3(%arg0: i32, %arg1: i32) -> (i32, i32) {
    %c0_i32 = arith.constant 0 : i32
    %c0_i32_0 = arith.constant 0 : i32
    %c0_i32_1 = arith.constant 0 : i32
    return %c0_i32, %c0_i32_0 : i32, i32
  }
  func.func @transform_4(%arg0: i32, %arg1: i32) -> (i32, i32, i32) {
    %c0_i32 = arith.constant 0 : i32
    %c0_i32_0 = arith.constant 0 : i32
    %c0_i32_1 = arith.constant 0 : i32
    return %arg0, %c0_i32, %c0_i32_0 : i32, i32, i32
  }
}

</mosaic_0001>

<llo_original>
// kernel: tpu_custom_call.1
$region0: #{tpu_custom_call.1}
  #allocation0 [shape = 'u32[]', space=smem, size = 0x4, offset = 0x4, fixed_abs, tag = 'smem constant byte address 0x4 - core index']
  #allocation1 [shape = 'u32[72,128]{1,0:T(1,128)}', space=vmem, size = 0x9000, scoped, tag = 'internal scratch']
  #allocation2 [shape = 'f32[1,16,8]{2,1,0:T(8,128)}', space=vmem, size = 0x2000, scoped, tag = 'scratch operand']
  #allocation3 [shape = 'f32[1,8,1]{2,1,0:T(8,128)}', space=vmem, size = 0x1000, scoped, tag = 'scratch operand']
  %s0 = inlined_call_operand.hbm [shape: f32[2,16,64], index: 0, kind: input, shape index: {}]
  %s1 = inlined_call_operand.vmem [shape: f32[8,16], index: 1, kind: input, shape index: {}]
  %s2 = inlined_call_operand.vmem [shape: f32[8,1], index: 2, kind: input, shape index: {}]
  %s3 = inlined_call_operand.hbm [shape: f32[8,16], index: 3, kind: input, shape index: {}]
  %s4 = inlined_call_operand.hbm [shape: f32[2,8,16], index: 4, kind: output, shape index: {}]
  %s5 = sld [smem:[#allocation0]]
  $region65: #{tpu_custom_call.1} parent=0
    _
  %s7 = ssub.s32 1, %s5
  %s8 = scalar_select 0, %s7, %s5
  $region1: #{tpu_custom_call.1} parent=0
    #allocation4 [shape = 'u8[16384]{0}', space=vmem, size = 0x4000, scoped, tag = 'input window, operand 0']
    #allocation5 [shape = 's32[2]{0}', space=sflag, size = 0x8, scoped, tag = 'scoped memory for tpu_custom_call.1']
    #allocation6 [shape = 's32[2]{0}', space=sflag, size = 0x8, scoped, tag = 'scoped memory for tpu_custom_call.1']
    #allocation7 [shape = 'u8[4096]{0}', space=vmem, size = 0x1000, scoped, tag = 'input window, operand 3, single buffered']
    #allocation8 [shape = 's32[1]{0}', space=sflag, size = 0x4, scoped, tag = 'scoped memory for tpu_custom_call.1']
    #allocation9 [shape = 'u8[8192]{0}', space=vmem, size = 0x2000, scoped, tag = 'output window, operand 0']
    %9 = vsyncpa [#allocation5], 0
    %s10 = scalar_lea.sflag [#allocation5], 1
    %11 = vsyncpa %s10, 0
    %12 = vsyncpa [#allocation8], 0
    %13 = vsyncpa [#allocation6], 0
    %s14 = scalar_lea.sflag [#allocation6], 1
    %15 = vsyncpa %s14, 0
    loop: start=0, step=1, limit=4
    $region2: #{tpu_custom_call.1} parent=1 // loop_pre_header
      _
    $region3: #{tpu_custom_call.1} parent=1 // loop_header
      %s17 = sphi 0, %s21
      %p18 = scmp.ge.s32.totalorder %s17, 4
      %s24 = sphi 0, %s36
      %s25 = sphi 0, %s32
      %s26 = sphi 0, %s24
      %s27 = sphi 0, %s25
      %s28 = sphi 0, %s26
      %s29 = sphi 0, %s27
      %s41 = sphi 0, %s43
      %s44 = sphi 0, %s41
      %s45 = sphi 0, %s44
      %s61 = sphi 0, %s45
      %s65 = sphi 0, %s65
      %s67 = sphi 0, %s65
      %s68 = sphi 0, %s67
      %s82 = sphi 0, %s68
      %s86 = sphi 0, %s86
      %s88 = sphi 0, %s86
      %s89 = sphi 0, %s88
      %s103 = sphi 0, %s89
      %s107 = sphi 0, %s107
      %s109 = sphi 0, %s107
      %s110 = sphi 0, %s109
      %s124 = sphi 0, %s110
      %s130 = sphi 0, %s132
      %s133 = sphi 0, %s130
      %s134 = sphi 0, %s133
      %s150 = sphi 0, %s134
    $region4: #{tpu_custom_call.1} parent=1 // loop_header_branch
      %20 = sbr.rel (%p18) target = $region8
    $region5: #{tpu_custom_call.1} parent=1 // loop_body
      %s22 = ssub.s32 %s17, 1
      %s23 = ssub.s32 %s17, 2
      %s30 = sadd.s32 1, %s25
      %p31 = scmp.ge.s32.totalorder %s30, 1
      %s32 = scalar_select %p31, 0, %s30
      %s33 = sadd.s32 1, %s24
      %s34 = scalar_select %p31, %s33, %s24
      %p35 = scmp.ge.s32.totalorder %s34, 2
      %s36 = scalar_select %p35, 0, %s34
      %s37 = ssub.s32 %s24, %s36
      %s38 = ssub.s32 %s25, %s32
      %s39 = sor.u32 %s37, %s38
      %p40 = scmp.eq.s32.totalorder %s39, 0
      %s42 = sadd.s32 %s41, 1
      %s43 = scalar_select %p40, %s41, %s42
      %p46 = pneg %p40
      %p47 = scmp.eq.s32.totalorder %s17, 1
      %p48 = por %p46, %p47
      %p49 = scmp.ne.s32.totalorder %s41, %s44
      %p50 = scmp.eq.s32.totalorder %s17, 0
      %p51 = por %p49, %p50
      %p52 = scmp.ne.s32.totalorder %s41, %s44
      %p53 = scmp.eq.s32.totalorder %s22, 1
      %p54 = por %p52, %p53
      %p55 = scmp.ne.s32.totalorder %s44, %s45
      %p56 = scmp.eq.s32.totalorder %s22, 0
      %p57 = por %p55, %p56
      %p58 = scmp.ne.s32.totalorder %s44, %s45
      %p59 = scmp.eq.s32.totalorder %s23, 1
      %p60 = por %p58, %p59
      %p62 = scmp.ne.s32.totalorder %s45, %s61
      %p63 = scmp.eq.s32.totalorder %s23, 0
      %p64 = por %p62, %p63
      %s66 = sadd.s32 %s65, 1
      %p69 = scmp.eq.s32.totalorder %s17, 1
      %p70 = scmp.ne.s32.totalorder %s65, %s67
      %p71 = scmp.eq.s32.totalorder %s17, 0
      %p72 = por %p70, %p71
      %p73 = scmp.ne.s32.totalorder %s65, %s67
      %p74 = scmp.eq.s32.totalorder %s22, 1
      %p75 = por %p73, %p74
      %p76 = scmp.ne.s32.totalorder %s67, %s68
      %p77 = scmp.eq.s32.totalorder %s22, 0
      %p78 = por %p76, %p77
      %p79 = scmp.ne.s32.totalorder %s67, %s68
      %p80 = scmp.eq.s32.totalorder %s23, 1
      %p81 = por %p79, %p80
      %p83 = scmp.ne.s32.totalorder %s68, %s82
      %p84 = scmp.eq.s32.totalorder %s23, 0
      %p85 = por %p83, %p84
      %s87 = sadd.s32 %s86, 1
      %p90 = scmp.eq.s32.totalorder %s17, 1
      %p91 = scmp.ne.s32.totalorder %s86, %s88
      %p92 = scmp.eq.s32.totalorder %s17, 0
      %p93 = por %p91, %p92
      %p94 = scmp.ne.s32.totalorder %s86, %s88
      %p95 = scmp.eq.s32.totalorder %s22, 1
      %p96 = por %p94, %p95
      %p97 = scmp.ne.s32.totalorder %s88, %s89
      %p98 = scmp.eq.s32.totalorder %s22, 0
      %p99 = por %p97, %p98
      %p100 = scmp.ne.s32.totalorder %s88, %s89
      %p101 = scmp.eq.s32.totalorder %s23, 1
      %p102 = por %p100, %p101
      %p104 = scmp.ne.s32.totalorder %s89, %s103
      %p105 = scmp.eq.s32.totalorder %s23, 0
      %p106 = por %p104, %p105
      %s108 = sadd.s32 %s107, 1
      %p111 = scmp.eq.s32.totalorder %s17, 1
      %p112 = scmp.ne.s32.totalorder %s107, %s109
      %p113 = scmp.eq.s32.totalorder %s17, 0
      %p114 = por %p112, %p113
      %p115 = scmp.ne.s32.totalorder %s107, %s109
      %p116 = scmp.eq.s32.totalorder %s22, 1
      %p117 = por %p115, %p116
      %p118 = scmp.ne.s32.totalorder %s109, %s110
      %p119 = scmp.eq.s32.totalorder %s22, 0
      %p120 = por %p118, %p119
      %p121 = scmp.ne.s32.totalorder %s109, %s110
      %p122 = scmp.eq.s32.totalorder %s23, 1
      %p123 = por %p121, %p122
      %p125 = scmp.ne.s32.totalorder %s110, %s124
      %p126 = scmp.eq.s32.totalorder %s23, 0
      %p127 = por %p125, %p126
      %s128 = ssub.s32 %s24, %s36
      %p129 = scmp.eq.s32.totalorder %s128, 0
      %s131 = sadd.s32 %s130, 1
      %s132 = scalar_select %p129, %s130, %s131
      %p135 = pneg %p129
      %p136 = scmp.eq.s32.totalorder %s17, 1
      %p137 = por %p135, %p136
      %p138 = scmp.ne.s32.totalorder %s130, %s133
      %p139 = scmp.eq.s32.totalorder %s17, 0
      %p140 = por %p138, %p139
      %p141 = scmp.ne.s32.totalorder %s130, %s133
      %p142 = scmp.eq.s32.totalorder %s22, 1
      %p143 = por %p141, %p142
      %p144 = scmp.ne.s32.totalorder %s133, %s134
      %p145 = scmp.eq.s32.totalorder %s22, 0
      %p146 = por %p144, %p145
      %p147 = scmp.ne.s32.totalorder %s133, %s134
      %p148 = scmp.eq.s32.totalorder %s23, 1
      %p149 = por %p147, %p148
      %p151 = scmp.ne.s32.totalorder %s134, %s150
      %p152 = scmp.eq.s32.totalorder %s23, 0
      %p153 = por %p151, %p152
      %p154 = scmp.le.s32.totalorder 1, %s17
      %p155 = scmp.lt.s32.totalorder %s17, 3
      %p156 = pnand %p154, %p155
      %p157 = pneg %p156
      // Predicated region
      $region9: #{tpu_custom_call.1} parent=5 // pred_check
        _
      $region10: #{tpu_custom_call.1} parent=5 // pred_check_branch
        %159 = sbr.rel (%p156) target = $region12
      $region11: #{tpu_custom_call.1} parent=5 // pred_region
        %s160 = ssub.s32 %s17, 1
        // Predicated region
        $region13: #{tpu_custom_call.1} parent=11 // pred_check
          %p161 = pneg %p78
        $region14: #{tpu_custom_call.1} parent=11 // pred_check_branch
          %163 = sbr.rel (%p161) target = $region16
        $region15: #{tpu_custom_call.1} parent=11 // pred_region
          _
        $region16: #{tpu_custom_call.1} parent=11 // pred_fallthru
          _
        // Predicated region
        $region17: #{tpu_custom_call.1} parent=11 // pred_check
          %p164 = pneg %p99
        $region18: #{tpu_custom_call.1} parent=11 // pred_check_branch
          %166 = sbr.rel (%p164) target = $region20
        $region19: #{tpu_custom_call.1} parent=11 // pred_region
          _
        $region20: #{tpu_custom_call.1} parent=11 // pred_fallthru
          _
        // Predicated region
        $region21: #{tpu_custom_call.1} parent=11 // pred_check
          %p167 = pneg %p120
        $region22: #{tpu_custom_call.1} parent=11 // pred_check_branch
          %169 = sbr.rel (%p167) target = $region24
        $region23: #{tpu_custom_call.1} parent=11 // pred_region
          %171 = vsyncadd [#allocation8], 0
          %s173 = sshll.u32 %s3, 4
          %s174 = int_to_ptr.hbm [resolvable:$true] %s173
          %s175 = sshll.u32 [#allocation7], 4
          %s176 = int_to_ptr.vmem [resolvable:$true] %s175
          %178 = dma.hbm_to_vmem [thread:$0]  %s174, 128, %s176, [#allocation8]
        $region24: #{tpu_custom_call.1} parent=11 // pred_fallthru
          _
      $region12: #{tpu_custom_call.1} parent=5 // pred_fallthru
        _
      %p179 = scmp.lt.s32.totalorder %s17, 2
      // Predicated region
      $region25: #{tpu_custom_call.1} parent=5 // pred_check
        %p180 = pneg %p179
      $region26: #{tpu_custom_call.1} parent=5 // pred_check_branch
        %182 = sbr.rel (%p180) target = $region28
      $region27: #{tpu_custom_call.1} parent=5 // pred_region
        // Predicated region
        $region29: #{tpu_custom_call.1} parent=27 // pred_check
          %p183 = pneg %p51
        $region30: #{tpu_custom_call.1} parent=27 // pred_check_branch
          %185 = sbr.rel (%p183) target = $region32
        $region31: #{tpu_custom_call.1} parent=27 // pred_region
          %s186 = sand.u32 %s41, 1
          %s187 = scalar_lea.sflag [#allocation5], %s186
          %s188 = sand.u32 %s41, 1
          %s189 = smul.addr %s188, 16
          %s190 = scalar_lea.vmem [#allocation4], %s189
          %192 = vsyncadd %s187, 0
          %s193 = smul.addr %s24, 2
          %s194 = sadd.s32 %s25, %s193
          %s195 = smul.addr %s194, 8
          %s196 = scalar_lea.hbm %s0, %s195
          %s197 = sshll.u32 %s196, 4
          %s198 = int_to_ptr.hbm [resolvable:$true] %s197
          %s199 = sshll.u32 %s190, 4
          %s200 = int_to_ptr.vmem [resolvable:$true] %s199
          %205 = dma.hbm_to_vmem [thread:$0]  %s198, 256, %s200, %s187, 128, 128, 8
        $region32: #{tpu_custom_call.1} parent=27 // pred_fallthru
          _
      $region28: #{tpu_custom_call.1} parent=5 // pred_fallthru
        _
      %p206 = scmp.le.s32.totalorder 1, %s17
      %p207 = scmp.lt.s32.totalorder %s17, 3
      %p208 = pnand %p206, %p207
      %p209 = pneg %p208
      // Predicated region
      $region33: #{tpu_custom_call.1} parent=5 // pred_check
        _
      $region34: #{tpu_custom_call.1} parent=5 // pred_check_branch
        %211 = sbr.rel (%p208) target = $region36
      $region35: #{tpu_custom_call.1} parent=5 // pred_region
        %s212 = ssub.s32 %s17, 1
        %s213 = sand.u32 %s44, 1
        %s214 = scalar_lea.sflag [#allocation5], %s213
        %s215 = sand.u32 %s44, 1
        %s216 = smul.addr %s215, 16
        %s217 = scalar_lea.vmem [#allocation4], %s216
        // Predicated region
        $region37: #{tpu_custom_call.1} parent=35 // pred_check
          %p218 = pneg %p57
        $region38: #{tpu_custom_call.1} parent=35 // pred_check_branch
          %220 = sbr.rel (%p218) target = $region40
        $region39: #{tpu_custom_call.1} parent=35 // pred_region
          %222 = dma.done %s214, 256
        $region40: #{tpu_custom_call.1} parent=35 // pred_fallthru
          _
        // Predicated region
        $region41: #{tpu_custom_call.1} parent=35 // pred_check
          %p223 = pneg %p120
        $region42: #{tpu_custom_call.1} parent=35 // pred_check_branch
          %225 = sbr.rel (%p223) target = $region44
        $region43: #{tpu_custom_call.1} parent=35 // pred_region
          %227 = dma.done [#allocation8], 128
        $region44: #{tpu_custom_call.1} parent=35 // pred_fallthru
          _
        %s228 = sand.u32 %s44, 1
        %s229 = scalar_lea.sflag [#allocation5], %s228
        %s230 = sand.u32 %s44, 1
        %s231 = smul.addr %s230, 16
        %s232 = scalar_lea.vmem [#allocation4], %s231
        %p233 = pneg %p57
        %p234 = pneg %p54
        %p235 = pneg %p78
        %p236 = pneg %p75
        %p237 = pneg %p99
        %p238 = pneg %p96
        %p239 = pneg %p120
        %p240 = pneg %p117
        %p241 = pneg %p146
        %p242 = pneg %p143
        %s243 = sand.u32 %s133, 1
        %s244 = scalar_lea.sflag [#allocation6], %s243
        %s245 = sand.u32 %s133, 1
        %s246 = smul.addr %s245, 8
        %s247 = scalar_lea.vmem [#allocation9], %s246
        %p248 = scmp.eq.s32.totalorder %s27, 0
        // Predicated region
        $region45: #{tpu_custom_call.1} parent=35 // pred_check
          %p249 = pneg %p248
        $region46: #{tpu_custom_call.1} parent=35 // pred_check_branch
          %251 = sbr.rel (%p249) target = $region48
        $region47: #{tpu_custom_call.1} parent=35 // pred_region
          %vm252 = vcmask 64512
          %253 = vst.msk [vmem:[#allocation2] sm:$0xff] %vm252, 0.0
          %254 = vst.msk [vmem:[#allocation2 + $0x8] sm:$0xff] %vm252, 0.0
          %vm255 = vcmask 7168
          %256 = vst.msk [vmem:[#allocation3] sm:$0xff] %vm255, 0.0
        $region48: #{tpu_custom_call.1} parent=35 // pred_fallthru
          _
        %v257 = vld [vmem:[%s1] sm:$0xff]
        %v258 = vld [vmem:[%s2] sm:$0xff]
        %v259 = vld [vmem:[%s217] sm:$0xff]
        %v260 = vld [vmem:[%s217 + $0x8] sm:$0xff]
        %v261 = vmul.f32 %v259, %v259
        %v262 = vmul.f32 %v260, %v260
        %vm263 = vcmask 523264
        %v264 = vsel %vm263, %v261, 0.0
        %v265 = vsel %vm263, %v262, 0.0
        %v266 = vadd.f32 %v264, %v265
        %v267 = vrot.slane %v266, 4
        %v268 = vadd.f32 %v266, %v267
        %v269 = vrot.slane %v268, 2
        %v270 = vadd.f32 %v268, %v269
        %v271 = vrot.slane %v270, 1
        %v272 = vadd.f32 %v270, %v271
        %v273 = vmax.f32 %v272, 1e-24
        %v274 = vrsqrt.pop %v273
        %v275 = vmul.f32 %v274, %v273
        %v276 = vmul.f32 %v275, %v274
        %v277 = vmul.f32 0.5, %v276
        %v278 = vsub.f32 1.5, %v277
        %v279 = vmul.f32 %v274, %v278
        %vm280 = vweird.f32 %v273
        %vm281 = vweird.f32 %v274
        %vm282 = vmor %vm280, %vm281
        %v283 = vsel %vm282, %v274, %v279
        %v284 = vmul.f32 %v259, %v283
        %v285 = vmul.f32 %v260, %v283
        %287 = vset.pattern.permute.xlu0 0
        %288 = vperm.xlu0 %287, %v258
        %v289 = vpop.permute.xlu0 %288
        %vm291 = vcmask 130048
        %v293 = vsel %vm291, %v257, 0
        %295 = vmatpush.msra.mxu0 0.0
        %296 = vmatpush.msra.mxu0 0.0
        %297 = vmatpush.msra.mxu0 0.0
        %298 = vmatpush.msra.mxu0 0.0
        %299 = vmatpush.msra.mxu0 0.0
        %300 = vmatpush.msra.mxu0 0.0
        %301 = vmatpush.msra.mxu0 0.0
        %302 = vmatpush.msra.mxu0 0.0
        %303 = vmatpush.msra.mxu0 0.0
        %304 = vmatpush.msra.mxu0 0.0
        %305 = vmatpush.msra.mxu0 0.0
        %306 = vmatpush.msra.mxu0 0.0
        %307 = vmatpush.msra.mxu0 0.0
        %308 = vmatpush.msra.mxu0 0.0
        %309 = vmatpush.msra.mxu0 %v285
        %310 = vmatpush.msra.mxu0 %v284
        %311 = vmatmul.f32.gmra.mxu0 %v293
        %v312 = vpop.f32.mrf.mxu0
        %v313 = vadd.f32 %v289, %v312
        %314 = vdwg.mxu0
        %v315 = vsel %vm263, %v313, -inf
        %v316 = vrot.slane %v315, 4
        %v317 = vmax.f32 %v315, %v316
        %v318 = vrot.slane %v317, 2
        %v319 = vmax.f32 %v317, %v318
        %v320 = vrot.slane %v319, 1
        %v321 = vmax.f32 %v319, %v320
        %v322 = vsub.f32 %v313, %v321
        %v323 = vmul.f32 %v322, 1.442695
        %v324 = vpow.pop %v323
        %v325 = vsel %vm263, %v324, 0.0
        %v326 = vrot.slane %v325, 4
        %v327 = vadd.f32 %v325, %v326
        %v328 = vrot.slane %v327, 2
        %v329 = vadd.f32 %v327, %v328
        %v330 = vrot.slane %v329, 1
        %v331 = vadd.f32 %v329, %v330
        %v332 = vrcp.pop %v331
        %v333 = vmul.f32 %v331, %v332
        %v334 = vsub.f32 1.0, %v333
        %v335 = vmul.f32 %v332, %v334
        %v336 = vadd.f32 %v332, %v335
        %vm337 = vweird.f32 %v331
        %vm338 = vweird.f32 %v332
        %vm339 = vmor %vm337, %vm338
        %v340 = vsel %vm339, %v332, %v336
        %v341 = vand.u32 2147483647, %v331
        %vm342 = vcmp.eq.f32.partialorder %v341, 8.507059e+37
        %v343 = vand.u32 %v331, 2147483648
        %v344 = vor.u32 1.1754944e-38, %v343
        %v345 = vsel %vm342, %v344, %v340
        %v346 = vmul.f32 %v324, %v345
        %v347 = vld [vmem:[#allocation3] sm:$0xff]
        %v348 = vsel %vm263, %v346, 0.0
        %349 = vadd.xlane.f32.xlu0 %v348
        %v350 = vpop.xlane.xlu0 %349
        %v351 = vadd.f32 %v347, %v350
        %vm352 = vcmask 7168
        %353 = vst.msk [vmem:[#allocation3] sm:$0xff] %vm352, %v351
        %v354 = vld [vmem:[#allocation2] sm:$0xff]
        %v355 = vld [vmem:[#allocation2 + $0x8] sm:$0xff]
        %v357 = vsel %vm263, %v284, 0
        %v360 = vsel %vm263, %v285, 0
        %v363 = vsel %vm263, %v346, 0
        %365 = vmatpush.xpose.msra.mxu0 0.0
        %366 = vmatpush.xpose.msra.mxu0 0.0
        %367 = vmatpush.xpose.msra.mxu0 0.0
        %368 = vmatpush.xpose.msra.mxu0 0.0
        %369 = vmatpush.xpose.msra.mxu0 0.0
        %370 = vmatpush.xpose.msra.mxu0 0.0
        %371 = vmatpush.xpose.msra.mxu0 0.0
        %372 = vmatpush.xpose.msra.mxu0 0.0
        %373 = vmatpush.xpose.msra.mxu0 0.0
        %374 = vmatpush.xpose.msra.mxu0 0.0
        %375 = vmatpush.xpose.msra.mxu0 0.0
        %376 = vmatpush.xpose.msra.mxu0 0.0
        %377 = vmatpush.xpose.msra.mxu0 0.0
        %378 = vmatpush.xpose.msra.mxu0 0.0
        %379 = vmatpush.xpose.msra.mxu0 0.0
        %380 = vmatpush.xpose.msra.mxu0 %v363
        %381 = vmatmul.f32.gmra.mxu0 %v357
        %v382 = vpop.f32.mrf.mxu0
        %v383 = vadd.f32 0.0, %v382
        %384 = vmatmul.f32.gmra.mxu0 %v360
        %v385 = vpop.f32.mrf.mxu0
        %v386 = vadd.f32 0.0, %v385
        %387 = vdwg.mxu0
        %v388 = vadd.f32 %v354, %v383
        %v389 = vadd.f32 %v355, %v386
        %vm390 = vcmask 64512
        %391 = vst.msk [vmem:[#allocation2] sm:$0xff] %vm390, %v388
        %392 = vst.msk [vmem:[#allocation2 + $0x8] sm:$0xff] %vm390, %v389
        // Predicated region
        $region49: #{tpu_custom_call.1} parent=35 // pred_check
          %p393 = pneg %p248
        $region50: #{tpu_custom_call.1} parent=35 // pred_check_branch
          %395 = sbr.rel (%p393) target = $region52
        $region51: #{tpu_custom_call.1} parent=35 // pred_region
          %v396 = vld [vmem:[#allocation3] sm:$0xff]
          %v397 = vld [vmem:[#allocation2] sm:$0xff]
          %v398 = vld [vmem:[#allocation2 + $0x8] sm:$0xff]
          %399 = vxpose.xlu0.b32.start [1/16] %v397, 128
          %400 = vxpose.xlu0.b32.cont [2/16] %v398, 128
          %401 = vxpose.xlu0.b32.cont [3/16] 0.0, 128
          %402 = vxpose.xlu0.b32.cont [4/16] 0.0, 128
          %403 = vxpose.xlu0.b32.cont [5/16] 0.0, 128
          %404 = vxpose.xlu0.b32.cont [6/16] 0.0, 128
          %405 = vxpose.xlu0.b32.cont [7/16] 0.0, 128
          %406 = vxpose.xlu0.b32.cont [8/16] 0.0, 128
          %407 = vxpose.xlu0.b32.cont [9/16] 0.0, 128
          %408 = vxpose.xlu0.b32.cont [10/16] 0.0, 128
          %409 = vxpose.xlu0.b32.cont [11/16] 0.0, 128
          %410 = vxpose.xlu0.b32.cont [12/16] 0.0, 128
          %411 = vxpose.xlu0.b32.cont [13/16] 0.0, 128
          %412 = vxpose.xlu0.b32.cont [14/16] 0.0, 128
          %413 = vxpose.xlu0.b32.cont [15/16] 0.0, 128
          %414 = vxpose.xlu0.b32.end [16/16] 0.0, 128
          %v415 = vpop.trf.xlu0
          %v416 = vpop.trf.xlu0
          %v417 = vpop.trf.xlu0
          %v418 = vpop.trf.xlu0
          %v419 = vpop.trf.xlu0
          %v420 = vpop.trf.xlu0
          %v421 = vpop.trf.xlu0
          %v422 = vpop.trf.xlu0
          %v423 = vpop.trf.xlu0
          %v424 = vpop.trf.xlu0
          %v425 = vpop.trf.xlu0
          %v426 = vpop.trf.xlu0
          %v427 = vpop.trf.xlu0
          %v428 = vpop.trf.xlu0
          %v429 = vpop.trf.xlu0
          %v430 = vpop.trf.xlu0
          %v431 = vld [vmem:[#allocation7] sm:$0xff]
          %433 = vset.pattern.permute.xlu0 0
          %434 = vperm.xlu0 %433, %v396
          %v435 = vpop.permute.xlu0 %434
          %v437 = vmul.f32 %v435, %v431
          %v438 = vsub.f32 %v415, %v437
          %v439 = vmul.f32 %v438, %v438
          %v440 = vsel %vm291, %v439, 0.0
          %441 = vadd.xlane.f32.xlu0 %v440
          %v442 = vpop.xlane.xlu0 %441
          %v443 = vmax.f32 %v442, 1e-24
          %v444 = vrsqrt.pop %v443
          %v445 = vmul.f32 %v444, %v443
          %v446 = vmul.f32 %v445, %v444
          %v447 = vmul.f32 0.5, %v446
          %v448 = vsub.f32 1.5, %v447
          %v449 = vmul.f32 %v444, %v448
          %vm450 = vweird.f32 %v443
          %vm451 = vweird.f32 %v444
          %vm452 = vmor %vm450, %vm451
          %v453 = vsel %vm452, %v444, %v449
          %v454 = vmul.f32 %v438, %v453
          %v455 = vmul.f32 %v454, %v454
          %v456 = vsel %vm291, %v455, 0.0
          %457 = vadd.xlane.f32.xlu0 %v456
          %v458 = vpop.xlane.xlu0 %457
          %v459 = vrot.slane %v458, 4
          %v460 = vadd.f32 %v458, %v459
          %v461 = vrot.slane %v460, 2
          %v462 = vadd.f32 %v460, %v461
          %v463 = vrot.slane %v462, 1
          %v464 = vadd.f32 %v462, %v463
          %v465 = vmax.f32 %v464, 1e-24
          %v466 = vrsqrt.pop %v465
          %v467 = vmul.f32 %v466, %v465
          %v468 = vmul.f32 %v467, %v466
          %v469 = vmul.f32 0.5, %v468
          %v470 = vsub.f32 1.5, %v469
          %v471 = vmul.f32 %v466, %v470
          %vm472 = vweird.f32 %v465
          %vm473 = vweird.f32 %v466
          %vm474 = vmor %vm472, %vm473
          %v475 = vsel %vm474, %v466, %v471
          %v476 = vmul.f32 %v454, %v475
          %477 = vst.msk [vmem:[%s247] sm:$0xff] %vm291, %v476
        $region52: #{tpu_custom_call.1} parent=35 // pred_fallthru
          _
        %s478 = sand.u32 %s133, 1
        %s479 = scalar_lea.sflag [#allocation6], %s478
        %s480 = sand.u32 %s133, 1
        %s481 = smul.addr %s480, 8
        %s482 = scalar_lea.vmem [#allocation9], %s481
        // Predicated region
        $region53: #{tpu_custom_call.1} parent=35 // pred_check
          %p483 = pneg %p143
        $region54: #{tpu_custom_call.1} parent=35 // pred_check_branch
          %485 = sbr.rel (%p483) target = $region56
        $region55: #{tpu_custom_call.1} parent=35 // pred_region
          %487 = vsyncadd %s479, 0
          %s488 = smul.addr %s26, 8
          %s489 = scalar_lea.hbm %s4, %s488
          %s491 = sshll.u32 %s482, 4
          %s492 = int_to_ptr.vmem [resolvable:$true] %s491
          %s493 = sshll.u32 %s489, 4
          %s494 = int_to_ptr.hbm [resolvable:$true] %s493
          %496 = dma.vmem_to_hbm [thread:$0]  %s492, 128, %s494, %s479
        $region56: #{tpu_custom_call.1} parent=35 // pred_fallthru
          _
      $region36: #{tpu_custom_call.1} parent=5 // pred_fallthru
        _
      %p497 = scmp.le.s32.totalorder 2, %s17
      // Predicated region
      $region57: #{tpu_custom_call.1} parent=5 // pred_check
        %p498 = pneg %p497
      $region58: #{tpu_custom_call.1} parent=5 // pred_check_branch
        %500 = sbr.rel (%p498) target = $region60
      $region59: #{tpu_custom_call.1} parent=5 // pred_region
        %s501 = ssub.s32 %s17, 2
        // Predicated region
        $region61: #{tpu_custom_call.1} parent=59 // pred_check
          %p502 = pneg %p149
        $region62: #{tpu_custom_call.1} parent=59 // pred_check_branch
          %504 = sbr.rel (%p502) target = $region64
        $region63: #{tpu_custom_call.1} parent=59 // pred_region
          %s505 = sand.u32 %s134, 1
          %s506 = scalar_lea.sflag [#allocation6], %s505
          %s507 = sand.u32 %s134, 1
          %s508 = smul.addr %s507, 8
          %s509 = scalar_lea.vmem [#allocation9], %s508
          %511 = dma.done %s506, 128
        $region64: #{tpu_custom_call.1} parent=59 // pred_fallthru
          _
      $region60: #{tpu_custom_call.1} parent=5 // pred_fallthru
        _
    $region6: #{tpu_custom_call.1} parent=1 // loop_footer
      %s21 = sadd.s32 1, %s17
    $region7: #{tpu_custom_call.1} parent=1 // loop_footer_branch
      %16 = sbr.rel target = $region3
    $region8: #{tpu_custom_call.1} parent=1 // loop_exit
      _
    %512 = vsyncpa [#allocation5], 1
    %s513 = scalar_lea.sflag [#allocation5], 1
    %514 = vsyncpa %s513, 1
    %515 = vsyncpa [#allocation8], 1
    %516 = vsyncpa [#allocation6], 1
    %s517 = scalar_lea.sflag [#allocation6], 1
    %518 = vsyncpa %s517, 1

</llo_original>
